<compile_context>
chip_gen: v5e
topology: v5e:2x2
jax: 0.10.0
libtpu: 0.0.40
codegen_flags: <defaults>
</compile_context>

<pallas_src>
import jax
import jax.numpy as jnp
from jax.experimental import pallas as pl
from jax.experimental.pallas import tpu as pltpu

# ---- static problem sizes -------------------------------------------------
B, N, T = 2, 16, 8
NFEAT, NHID, NCLASS, NEDGE, K = 8, 32, 4, 4, 3
BN = B * N          # 32 : batch folded into rows for node tensors
BT = B * T          # 16 : batch folded into rows for target tensors


# ---- Pallas kernel: whole forward in a single program ----------------------
def dagnn_kernel(x_ref, adj_ref, tx_ref, ids_ref,
                 w1_ref, b1_ref, w2_ref, b2_ref,
                 pw_ref, pb_ref, wlg_ref, wle_ref, bl_ref,
                 out_ref):
    x = x_ref[...]        # (BN, NFEAT)
    adj = adj_ref[...]    # (BN, BN) block-diagonal over batch

    # lin1 + relu   (dropout = identity, eval mode)
    # TODO(synk): training-mode dropout is not implemented (eval-mode identity).
    h = jnp.maximum(
        jnp.dot(x, w1_ref[...], preferred_element_type=jnp.float32) + b1_ref[...],
        0.0)
    # lin2
    z = jnp.dot(h, w2_ref[...], preferred_element_type=jnp.float32) + b2_ref[...]

    # Prop1: K hops, one (BN,BN)@(BN,C) dot per hop for ALL batches at once.
    # Static unrolled loop (K=3) -> MXU pushes pipeline back-to-back.
    preds = [z]
    cur = z
    for _ in range(K):
        cur = jnp.dot(adj, cur, preferred_element_type=jnp.float32)
        preds.append(cur)

    # Fused retain-score projection: one ((K+1)*BN, C) @ (C, 1) dot,
    # sigmoid on EUP, weighted sum on the VPU via aligned sublane slices.
    pcat = jnp.concatenate(preds, axis=0)                        # (128, C)
    score = jax.nn.sigmoid(
        jnp.dot(pcat, pw_ref[...], preferred_element_type=jnp.float32)
        + pb_ref[...])                                           # (128, 1)
    weighted = score * pcat                                      # (128, C)
    node_out = weighted[0:BN]
    for k in range(1, K + 1):
        node_out = node_out + weighted[k * BN:(k + 1) * BN]      # (BN, C)

    # Fused one-hot gather: single (3*BT, BN) @ (BN, C) dot.
    # Integer iota compare against batch-offset int32 ids.
    ids = ids_ref[...]                                           # (3*BT, 1) int32
    iota_n = jax.lax.broadcasted_iota(jnp.int32, (3 * BT, BN), 1)
    onehot = (iota_n == ids).astype(jnp.float32)                 # (3*BT, BN)
    g = jnp.dot(onehot, node_out, preferred_element_type=jnp.float32)  # (3*BT, C)

    # Final linear with pre-split weight blocks (no lane concatenate) + relu.
    y = (jnp.dot(g[0 * BT:1 * BT], wlg_ref[0], preferred_element_type=jnp.float32)
         + jnp.dot(g[1 * BT:2 * BT], wlg_ref[1], preferred_element_type=jnp.float32)
         + jnp.dot(g[2 * BT:3 * BT], wlg_ref[2], preferred_element_type=jnp.float32)
         + jnp.dot(tx_ref[...], wle_ref[...], preferred_element_type=jnp.float32)
         + bl_ref[...])
    y = jnp.maximum(y, 0.0)                                      # (BT, NCLASS)

    # log_softmax over torch dim=1 (the T axis) -> per-batch row blocks of y.
    for b in range(B):                                           # static, B=2
        yb = y[b * T:(b + 1) * T]                                # (T, NCLASS)
        m = jnp.max(yb, axis=0, keepdims=True)
        lse = jnp.log(jnp.sum(jnp.exp(yb - m), axis=0, keepdims=True)) + m
        out_ref[b] = yb - lse


# ---- wrapper ---------------------------------------------------------------
def dagnn_forward(x, adj, tx, tid, params):
    w1, b1, w2, b2, pw, pb, wl, bl = params

    # Fold batch into the row dimension (single grid step).
    x_flat = x.reshape(BN, NFEAT)
    tx_flat = tx.reshape(BT, NEDGE)

    # Block-diagonal adjacency over the folded batch: (BN, BN).
    adj_bd = (jnp.eye(B, dtype=adj.dtype)[:, None, :, None]
              * adj[:, :, None, :]).reshape(BN, BN)

    # Batch-offset node ids, stacked per gather column j: rows j*BT + b*T + t.
    tid_off = tid.astype(jnp.int32) + (jnp.arange(B, dtype=jnp.int32) * N)[:, None, None]
    ids = jnp.transpose(tid_off, (2, 0, 1)).reshape(3 * BT, 1)   # (3*BT, 1) int32

    # Pre-split final-linear weights: 3 gather blocks + edge-feature block.
    wl_g = wl[:3 * NCLASS].reshape(3, NCLASS, NCLASS)            # (3, C, C)
    wl_e = wl[3 * NCLASS:]                                       # (NEDGE, C)

    args = (x_flat, adj_bd, tx_flat, ids, w1, b1, w2, b2, pw, pb, wl_g, wl_e, bl)

    def fullspec(a):
        nd = a.ndim
        return pl.BlockSpec(a.shape, lambda i, _nd=nd: (0,) * _nd)

    grid_spec = pltpu.PrefetchScalarGridSpec(
        num_scalar_prefetch=0,
        grid=(1,),
        in_specs=[fullspec(a) for a in args],
        out_specs=pl.BlockSpec((B, T, NCLASS), lambda i: (0, 0, 0)),
    )
    return pl.pallas_call(
        dagnn_kernel,
        out_shape=jax.ShapeDtypeStruct((B, T, NCLASS), jnp.float32),
        grid_spec=grid_spec,
        compiler_params=pltpu.CompilerParams(
            dimension_semantics=("arbitrary",)),
    )(*args)


# ---- pure-JAX reference (mirrors the torch module) -------------------------
def dagnn_reference(x, adj, tx, tid, params):
    w1, b1, w2, b2, pw, pb, wl, bl = params
    h = jax.nn.relu(x @ w1 + b1)
    z = h @ w2 + b2
    preds = [z]
    cur = z
    for _ in range(K):
        cur = jnp.einsum('bnm,bmc->bnc', adj, cur)
        preds.append(cur)
    pps = jnp.stack(preds, axis=2)                              # (B, N, K+1, C)
    score = jax.nn.sigmoid(jnp.squeeze(pps @ pw, -1) + pb[0, 0])
    node_out = jnp.einsum('bnk,bnkc->bnc', score, pps)          # (B, N, C)
    g = [jnp.take_along_axis(
            node_out,
            jnp.repeat(tid[:, :, j:j + 1], node_out.shape[2], axis=2),
            axis=1)
         for j in range(3)]
    feat = jnp.concatenate(g + [tx], axis=-1)
    y = jax.nn.relu(feat @ wl + bl)
    return jax.nn.log_softmax(y, axis=1)


# ---- deterministic params + run --------------------------------------------
def init_linear(key, din, dout):
    k1, k2 = jax.random.split(key)
    lim = 1.0 / (din ** 0.5)
    w = jax.random.uniform(k1, (din, dout), jnp.float32, -lim, lim)
    b = jax.random.uniform(k2, (1, dout), jnp.float32, -lim, lim)
    return w, b


if __name__ == "__main__":
    key = jax.random.PRNGKey(0)
    ks = jax.random.split(key, 8)

    x = jax.random.normal(ks[0], (B, N, NFEAT), jnp.float32)
    adj = jax.random.uniform(ks[1], (B, N, N), jnp.float32)
    adj = adj / jnp.sum(adj, axis=-1, keepdims=True)
    tx = jax.random.normal(ks[2], (B, T, NEDGE), jnp.float32)
    tid = jax.random.randint(ks[3], (B, T, 3), 0, N, jnp.int32)

    w1, b1 = init_linear(ks[4], NFEAT, NHID)
    w2, b2 = init_linear(ks[5], NHID, NCLASS)
    pw, pb = init_linear(ks[6], NCLASS, 1)
    wl, bl = init_linear(ks[7], 3 * NCLASS + NEDGE, NCLASS)
    params = (w1, b1, w2, b2, pw, pb, wl, bl)

    out = dagnn_forward(x, adj, tx, tid, params)
    out = jax.block_until_ready(out)

    ref = dagnn_reference(x, adj, tx, tid, params)
    assert out.shape == (B, T, NCLASS)
    assert jnp.allclose(out, ref, atol=1e-4, rtol=1e-4), (out, ref)
    print("KERNEL_OK")
</pallas_src>

<mosaic_0001>
module attributes {stable_mosaic.version = 11 : i64} {
  func.func @dagnn_kernel(%arg0: i32, %arg1: memref<32x8xf32, #tpu.memory_space<vmem>>, %arg2: memref<32x32xf32, #tpu.memory_space<vmem>>, %arg3: memref<16x4xf32, #tpu.memory_space<vmem>>, %arg4: memref<48x1xi32, #tpu.memory_space<vmem>>, %arg5: memref<8x32xf32, #tpu.memory_space<vmem>>, %arg6: memref<1x32xf32, #tpu.memory_space<vmem>>, %arg7: memref<32x4xf32, #tpu.memory_space<vmem>>, %arg8: memref<1x4xf32, #tpu.memory_space<vmem>>, %arg9: memref<4x1xf32, #tpu.memory_space<vmem>>, %arg10: memref<1x1xf32, #tpu.memory_space<vmem>>, %arg11: memref<3x4x4xf32, #tpu.memory_space<vmem>>, %arg12: memref<4x4xf32, #tpu.memory_space<vmem>>, %arg13: memref<1x4xf32, #tpu.memory_space<vmem>>, %arg14: memref<2x8x4xf32, #tpu.memory_space<vmem>>) attributes {dimension_semantics = [#tpu.dimension_semantics<arbitrary>], iteration_bounds = array<i64: 1>, scalar_prefetch = 0 : i64, scratch_operands = 0 : i64, tpu.core_type = #tpu.core_type<tc>, window_params = [{pipeline_mode = #tpu.pipeline_mode<synchronous>, transform_indices = @transform_0, window_bounds = array<i64: 32, 8>}, {pipeline_mode = #tpu.pipeline_mode<synchronous>, transform_indices = @transform_1, window_bounds = array<i64: 32, 32>}, {pipeline_mode = #tpu.pipeline_mode<synchronous>, transform_indices = @transform_2, window_bounds = array<i64: 16, 4>}, {pipeline_mode = #tpu.pipeline_mode<synchronous>, transform_indices = @transform_3, window_bounds = array<i64: 48, 1>}, {pipeline_mode = #tpu.pipeline_mode<synchronous>, transform_indices = @transform_4, window_bounds = array<i64: 8, 32>}, {pipeline_mode = #tpu.pipeline_mode<synchronous>, transform_indices = @transform_5, window_bounds = array<i64: 1, 32>}, {pipeline_mode = #tpu.pipeline_mode<synchronous>, transform_indices = @transform_6, window_bounds = array<i64: 32, 4>}, {pipeline_mode = #tpu.pipeline_mode<synchronous>, transform_indices = @transform_7, window_bounds = array<i64: 1, 4>}, {pipeline_mode = #tpu.pipeline_mode<synchronous>, transform_indices = @transform_8, window_bounds = array<i64: 4, 1>}, {pipeline_mode = #tpu.pipeline_mode<synchronous>, transform_indices = @transform_9, window_bounds = array<i64: 1, 1>}, {pipeline_mode = #tpu.pipeline_mode<synchronous>, transform_indices = @transform_10, window_bounds = array<i64: 3, 4, 4>}, {pipeline_mode = #tpu.pipeline_mode<synchronous>, transform_indices = @transform_11, window_bounds = array<i64: 4, 4>}, {pipeline_mode = #tpu.pipeline_mode<synchronous>, transform_indices = @transform_12, window_bounds = array<i64: 1, 4>}, {pipeline_mode = #tpu.pipeline_mode<synchronous>, transform_indices = @transform_13, window_bounds = array<i64: 2, 8, 4>}]} {
    %c0 = arith.constant 0 : index
    %c0_0 = arith.constant 0 : index
    %0 = vector.load %arg1[%c0, %c0_0] : memref<32x8xf32, #tpu.memory_space<vmem>>, vector<32x8xf32>
    %c0_1 = arith.constant 0 : index
    %c0_2 = arith.constant 0 : index
    %1 = vector.load %arg2[%c0_1, %c0_2] : memref<32x32xf32, #tpu.memory_space<vmem>>, vector<32x32xf32>
    %c0_3 = arith.constant 0 : index
    %c0_4 = arith.constant 0 : index
    %2 = vector.load %arg5[%c0_3, %c0_4] : memref<8x32xf32, #tpu.memory_space<vmem>>, vector<8x32xf32>
    %cst = arith.constant dense<0.000000e+00> : vector<32x32xf32>
    %3 = tpu.matmul %0, %2, %cst {dimension_numbers = #tpu.dot_dimension_numbers<[1], [0], [0], [1], [0, 0, 1, 1], [], []>} : vector<32x8xf32>, vector<8x32xf32>, vector<32x32xf32> -> vector<32x32xf32>
    %c0_5 = arith.constant 0 : index
    %c0_6 = arith.constant 0 : index
    %4 = vector.load %arg6[%c0_5, %c0_6] : memref<1x32xf32, #tpu.memory_space<vmem>>, vector<1x32xf32>
    %5 = vector.broadcast %4 : vector<1x32xf32> to vector<32x32xf32>
    %6 = arith.addf %3, %5 : vector<32x32xf32>
    %cst_7 = arith.constant 0.000000e+00 : f32
    %7 = vector.broadcast %cst_7 : f32 to vector<32x32xf32>
    %8 = arith.maximumf %6, %7 : vector<32x32xf32>
    %c0_8 = arith.constant 0 : index
    %c0_9 = arith.constant 0 : index
    %9 = vector.load %arg7[%c0_8, %c0_9] : memref<32x4xf32, #tpu.memory_space<vmem>>, vector<32x4xf32>
    %cst_10 = arith.constant dense<0.000000e+00> : vector<32x4xf32>
    %10 = tpu.matmul %8, %9, %cst_10 {dimension_numbers = #tpu.dot_dimension_numbers<[1], [0], [0], [1], [0, 0, 1, 1], [], []>} : vector<32x32xf32>, vector<32x4xf32>, vector<32x4xf32> -> vector<32x4xf32>
    %c0_11 = arith.constant 0 : index
    %c0_12 = arith.constant 0 : index
    %11 = vector.load %arg8[%c0_11, %c0_12] : memref<1x4xf32, #tpu.memory_space<vmem>>, vector<1x4xf32>
    %12 = vector.broadcast %11 : vector<1x4xf32> to vector<32x4xf32>
    %13 = arith.addf %10, %12 : vector<32x4xf32>
    %cst_13 = arith.constant dense<0.000000e+00> : vector<32x4xf32>
    %14 = tpu.matmul %1, %13, %cst_13 {dimension_numbers = #tpu.dot_dimension_numbers<[1], [0], [0], [1], [0, 0, 1, 1], [], []>} : vector<32x32xf32>, vector<32x4xf32>, vector<32x4xf32> -> vector<32x4xf32>
    %cst_14 = arith.constant dense<0.000000e+00> : vector<32x4xf32>
    %15 = tpu.matmul %1, %14, %cst_14 {dimension_numbers = #tpu.dot_dimension_numbers<[1], [0], [0], [1], [0, 0, 1, 1], [], []>} : vector<32x32xf32>, vector<32x4xf32>, vector<32x4xf32> -> vector<32x4xf32>
    %cst_15 = arith.constant dense<0.000000e+00> : vector<32x4xf32>
    %16 = tpu.matmul %1, %15, %cst_15 {dimension_numbers = #tpu.dot_dimension_numbers<[1], [0], [0], [1], [0, 0, 1, 1], [], []>} : vector<32x32xf32>, vector<32x4xf32>, vector<32x4xf32> -> vector<32x4xf32>
    %17 = tpu.concatenate %13, %14, %15, %16 in 0 : vector<32x4xf32>, vector<32x4xf32>, vector<32x4xf32>, vector<32x4xf32> -> vector<128x4xf32>
    %c0_16 = arith.constant 0 : index
    %c0_17 = arith.constant 0 : index
    %18 = vector.load %arg9[%c0_16, %c0_17] : memref<4x1xf32, #tpu.memory_space<vmem>>, vector<4x1xf32>
    %cst_18 = arith.constant dense<0.000000e+00> : vector<128x1xf32>
    %19 = tpu.matmul %17, %18, %cst_18 {dimension_numbers = #tpu.dot_dimension_numbers<[1], [0], [0], [1], [0, 0, 1, 1], [], []>} : vector<128x4xf32>, vector<4x1xf32>, vector<128x1xf32> -> vector<128x1xf32>
    %c0_19 = arith.constant 0 : index
    %c0_20 = arith.constant 0 : index
    %20 = vector.load %arg10[%c0_19, %c0_20] : memref<1x1xf32, #tpu.memory_space<vmem>>, vector<1x1xf32>
    %21 = vector.broadcast %20 : vector<1x1xf32> to vector<128x1xf32>
    %22 = arith.addf %19, %21 : vector<128x1xf32>
    %23 = arith.negf %22 : vector<128x1xf32>
    %24 = math.exp %23 : vector<128x1xf32>
    %cst_21 = arith.constant 1.000000e+00 : f32
    %25 = vector.broadcast %cst_21 : f32 to vector<128x1xf32>
    %26 = arith.addf %25, %24 : vector<128x1xf32>
    %27 = arith.divf %25, %26 : vector<128x1xf32>
    %28 = vector.broadcast %27 : vector<128x1xf32> to vector<128x4xf32>
    %29 = arith.mulf %28, %17 : vector<128x4xf32>
    %30 = vector.extract_strided_slice %29 {offsets = [0, 0], sizes = [32, 4], strides = [1, 1]} : vector<128x4xf32> to vector<32x4xf32>
    %31 = vector.extract_strided_slice %29 {offsets = [32, 0], sizes = [32, 4], strides = [1, 1]} : vector<128x4xf32> to vector<32x4xf32>
    %32 = arith.addf %30, %31 : vector<32x4xf32>
    %33 = vector.extract_strided_slice %29 {offsets = [64, 0], sizes = [32, 4], strides = [1, 1]} : vector<128x4xf32> to vector<32x4xf32>
    %34 = arith.addf %32, %33 : vector<32x4xf32>
    %35 = vector.extract_strided_slice %29 {offsets = [96, 0], sizes = [32, 4], strides = [1, 1]} : vector<128x4xf32> to vector<32x4xf32>
    %36 = arith.addf %34, %35 : vector<32x4xf32>
    %c0_22 = arith.constant 0 : index
    %c0_23 = arith.constant 0 : index
    %37 = vector.load %arg4[%c0_22, %c0_23] : memref<48x1xi32, #tpu.memory_space<vmem>>, vector<48x1xi32>
    %38 = tpu.iota {dimensions = array<i32: 1>} : vector<48x32xi32>
    %39 = vector.broadcast %37 : vector<48x1xi32> to vector<48x32xi32>
    %40 = arith.cmpi eq, %38, %39 : vector<48x32xi32>
    %41 = arith.extui %40 : vector<48x32xi1> to vector<48x32xi32>
    %42 = arith.sitofp %41 : vector<48x32xi32> to vector<48x32xf32>
    %cst_24 = arith.constant dense<0.000000e+00> : vector<48x4xf32>
    %43 = tpu.matmul %42, %36, %cst_24 {dimension_numbers = #tpu.dot_dimension_numbers<[1], [0], [0], [1], [0, 0, 1, 1], [], []>} : vector<48x32xf32>, vector<32x4xf32>, vector<48x4xf32> -> vector<48x4xf32>
    %44 = vector.extract_strided_slice %43 {offsets = [0, 0], sizes = [16, 4], strides = [1, 1]} : vector<48x4xf32> to vector<16x4xf32>
    %c0_25 = arith.constant 0 : index
    %c0_26 = arith.constant 0 : index
    %c0_27 = arith.constant 0 : index
    %45 = vector.load %arg11[%c0_25, %c0_26, %c0_27] : memref<3x4x4xf32, #tpu.memory_space<vmem>>, vector<1x4x4xf32>
    %46 = vector.shape_cast %45 : vector<1x4x4xf32> to vector<4x4xf32>
    %cst_28 = arith.constant dense<0.000000e+00> : vector<16x4xf32>
    %47 = tpu.matmul %44, %46, %cst_28 {dimension_numbers = #tpu.dot_dimension_numbers<[1], [0], [0], [1], [0, 0, 1, 1], [], []>} : vector<16x4xf32>, vector<4x4xf32>, vector<16x4xf32> -> vector<16x4xf32>
    %48 = vector.extract_strided_slice %43 {offsets = [16, 0], sizes = [16, 4], strides = [1, 1]} : vector<48x4xf32> to vector<16x4xf32>
    %c1 = arith.constant 1 : index
    %c0_29 = arith.constant 0 : index
    %c0_30 = arith.constant 0 : index
    %49 = vector.load %arg11[%c1, %c0_29, %c0_30] : memref<3x4x4xf32, #tpu.memory_space<vmem>>, vector<1x4x4xf32>
    %50 = vector.shape_cast %49 : vector<1x4x4xf32> to vector<4x4xf32>
    %cst_31 = arith.constant dense<0.000000e+00> : vector<16x4xf32>
    %51 = tpu.matmul %48, %50, %cst_31 {dimension_numbers = #tpu.dot_dimension_numbers<[1], [0], [0], [1], [0, 0, 1, 1], [], []>} : vector<16x4xf32>, vector<4x4xf32>, vector<16x4xf32> -> vector<16x4xf32>
    %52 = arith.addf %47, %51 : vector<16x4xf32>
    %53 = vector.extract_strided_slice %43 {offsets = [32, 0], sizes = [16, 4], strides = [1, 1]} : vector<48x4xf32> to vector<16x4xf32>
    %c2 = arith.constant 2 : index
    %c0_32 = arith.constant 0 : index
    %c0_33 = arith.constant 0 : index
    %54 = vector.load %arg11[%c2, %c0_32, %c0_33] : memref<3x4x4xf32, #tpu.memory_space<vmem>>, vector<1x4x4xf32>
    %55 = vector.shape_cast %54 : vector<1x4x4xf32> to vector<4x4xf32>
    %cst_34 = arith.constant dense<0.000000e+00> : vector<16x4xf32>
    %56 = tpu.matmul %53, %55, %cst_34 {dimension_numbers = #tpu.dot_dimension_numbers<[1], [0], [0], [1], [0, 0, 1, 1], [], []>} : vector<16x4xf32>, vector<4x4xf32>, vector<16x4xf32> -> vector<16x4xf32>
    %57 = arith.addf %52, %56 : vector<16x4xf32>
    %c0_35 = arith.constant 0 : index
    %c0_36 = arith.constant 0 : index
    %58 = vector.load %arg3[%c0_35, %c0_36] : memref<16x4xf32, #tpu.memory_space<vmem>>, vector<16x4xf32>
    %c0_37 = arith.constant 0 : index
    %c0_38 = arith.constant 0 : index
    %59 = vector.load %arg12[%c0_37, %c0_38] : memref<4x4xf32, #tpu.memory_space<vmem>>, vector<4x4xf32>
    %cst_39 = arith.constant dense<0.000000e+00> : vector<16x4xf32>
    %60 = tpu.matmul %58, %59, %cst_39 {dimension_numbers = #tpu.dot_dimension_numbers<[1], [0], [0], [1], [0, 0, 1, 1], [], []>} : vector<16x4xf32>, vector<4x4xf32>, vector<16x4xf32> -> vector<16x4xf32>
    %61 = arith.addf %57, %60 : vector<16x4xf32>
    %c0_40 = arith.constant 0 : index
    %c0_41 = arith.constant 0 : index
    %62 = vector.load %arg13[%c0_40, %c0_41] : memref<1x4xf32, #tpu.memory_space<vmem>>, vector<1x4xf32>
    %63 = vector.broadcast %62 : vector<1x4xf32> to vector<16x4xf32>
    %64 = arith.addf %61, %63 : vector<16x4xf32>
    %cst_42 = arith.constant 0.000000e+00 : f32
    %65 = vector.broadcast %cst_42 : f32 to vector<16x4xf32>
    %66 = arith.maximumf %64, %65 : vector<16x4xf32>
    %67 = vector.extract_strided_slice %66 {offsets = [0, 0], sizes = [8, 4], strides = [1, 1]} : vector<16x4xf32> to vector<8x4xf32>
    %cst_43 = arith.constant dense<0xFF800000> : vector<4xf32>
    %68 = vector.multi_reduction <maximumf>, %67, %cst_43 [0] : vector<8x4xf32> to vector<4xf32>
    %69 = vector.shape_cast %68 : vector<4xf32> to vector<1x4xf32>
    %70 = vector.broadcast %69 : vector<1x4xf32> to vector<8x4xf32>
    %71 = arith.subf %67, %70 : vector<8x4xf32>
    %72 = math.exp %71 : vector<8x4xf32>
    %cst_44 = arith.constant dense<0.000000e+00> : vector<4xf32>
    %73 = vector.multi_reduction <add>, %72, %cst_44 [0] : vector<8x4xf32> to vector<4xf32>
    %74 = vector.shape_cast %73 : vector<4xf32> to vector<1x4xf32>
    %75 = math.log %74 : vector<1x4xf32>
    %76 = arith.addf %75, %69 : vector<1x4xf32>
    %77 = vector.broadcast %76 : vector<1x4xf32> to vector<8x4xf32>
    %78 = arith.subf %67, %77 : vector<8x4xf32>
    %c0_45 = arith.constant 0 : index
    %c0_46 = arith.constant 0 : index
    %c0_47 = arith.constant 0 : index
    %79 = vector.load %arg14[%c0_45, %c0_46, %c0_47] : memref<2x8x4xf32, #tpu.memory_space<vmem>>, vector<1x8x4xf32>
    %80 = vector.shape_cast %79 : vector<1x8x4xf32> to vector<8x4xf32>
    %81 = vector.shape_cast %78 : vector<8x4xf32> to vector<1x8x4xf32>
    tpu.vector_store %arg14[%c0_45, %c0_46, %c0_47], %81 {strides = array<i32>} : memref<2x8x4xf32, #tpu.memory_space<vmem>>, vector<1x8x4xf32>,
    %82 = vector.extract_strided_slice %66 {offsets = [8, 0], sizes = [8, 4], strides = [1, 1]} : vector<16x4xf32> to vector<8x4xf32>
    %cst_48 = arith.constant dense<0xFF800000> : vector<4xf32>
    %83 = vector.multi_reduction <maximumf>, %82, %cst_48 [0] : vector<8x4xf32> to vector<4xf32>
    %84 = vector.shape_cast %83 : vector<4xf32> to vector<1x4xf32>
    %85 = vector.broadcast %84 : vector<1x4xf32> to vector<8x4xf32>
    %86 = arith.subf %82, %85 : vector<8x4xf32>
    %87 = math.exp %86 : vector<8x4xf32>
    %cst_49 = arith.constant dense<0.000000e+00> : vector<4xf32>
    %88 = vector.multi_reduction <add>, %87, %cst_49 [0] : vector<8x4xf32> to vector<4xf32>
    %89 = vector.shape_cast %88 : vector<4xf32> to vector<1x4xf32>
    %90 = math.log %89 : vector<1x4xf32>
    %91 = arith.addf %90, %84 : vector<1x4xf32>
    %92 = vector.broadcast %91 : vector<1x4xf32> to vector<8x4xf32>
    %93 = arith.subf %82, %92 : vector<8x4xf32>
    %c1_50 = arith.constant 1 : index
    %c0_51 = arith.constant 0 : index
    %c0_52 = arith.constant 0 : index
    %94 = vector.load %arg14[%c1_50, %c0_51, %c0_52] : memref<2x8x4xf32, #tpu.memory_space<vmem>>, vector<1x8x4xf32>
    %95 = vector.shape_cast %94 : vector<1x8x4xf32> to vector<8x4xf32>
    %96 = vector.shape_cast %93 : vector<8x4xf32> to vector<1x8x4xf32>
    tpu.vector_store %arg14[%c1_50, %c0_51, %c0_52], %96 {strides = array<i32>} : memref<2x8x4xf32, #tpu.memory_space<vmem>>, vector<1x8x4xf32>,
    return
  }
  func.func @transform_0(%arg0: i32) -> (i32, i32) {
    %c0_i32 = arith.constant 0 : i32
    %c0_i32_0 = arith.constant 0 : i32
    %c0_i32_1 = arith.constant 0 : i32
    return %c0_i32, %c0_i32_0 : i32, i32
  }
  func.func @transform_1(%arg0: i32) -> (i32, i32) {
    %c0_i32 = arith.constant 0 : i32
    %c0_i32_0 = arith.constant 0 : i32
    %c0_i32_1 = arith.constant 0 : i32
    return %c0_i32, %c0_i32_0 : i32, i32
  }
  func.func @transform_2(%arg0: i32) -> (i32, i32) {
    %c0_i32 = arith.constant 0 : i32
    %c0_i32_0 = arith.constant 0 : i32
    %c0_i32_1 = arith.constant 0 : i32
    return %c0_i32, %c0_i32_0 : i32, i32
  }
  func.func @transform_3(%arg0: i32) -> (i32, i32) {
    %c0_i32 = arith.constant 0 : i32
    %c0_i32_0 = arith.constant 0 : i32
    %c0_i32_1 = arith.constant 0 : i32
    return %c0_i32, %c0_i32_0 : i32, i32
  }
  func.func @transform_4(%arg0: i32) -> (i32, i32) {
    %c0_i32 = arith.constant 0 : i32
    %c0_i32_0 = arith.constant 0 : i32
    %c0_i32_1 = arith.constant 0 : i32
    return %c0_i32, %c0_i32_0 : i32, i32
  }
  func.func @transform_5(%arg0: i32) -> (i32, i32) {
    %c0_i32 = arith.constant 0 : i32
    %c0_i32_0 = arith.constant 0 : i32
    %c0_i32_1 = arith.constant 0 : i32
    return %c0_i32, %c0_i32_0 : i32, i32
  }
  func.func @transform_6(%arg0: i32) -> (i32, i32) {
    %c0_i32 = arith.constant 0 : i32
    %c0_i32_0 = arith.constant 0 : i32
    %c0_i32_1 = arith.constant 0 : i32
    return %c0_i32, %c0_i32_0 : i32, i32
  }
  func.func @transform_7(%arg0: i32) -> (i32, i32) {
    %c0_i32 = arith.constant 0 : i32
    %c0_i32_0 = arith.constant 0 : i32
    %c0_i32_1 = arith.constant 0 : i32
    return %c0_i32, %c0_i32_0 : i32, i32
  }
  func.func @transform_8(%arg0: i32) -> (i32, i32) {
    %c0_i32 = arith.constant 0 : i32
    %c0_i32_0 = arith.constant 0 : i32
    %c0_i32_1 = arith.constant 0 : i32
    return %c0_i32, %c0_i32_0 : i32, i32
  }
  func.func @transform_9(%arg0: i32) -> (i32, i32) {
    %c0_i32 = arith.constant 0 : i32
    %c0_i32_0 = arith.constant 0 : i32
    %c0_i32_1 = arith.constant 0 : i32
    return %c0_i32, %c0_i32_0 : i32, i32
  }
  func.func @transform_10(%arg0: i32) -> (i32, i32, i32) {
    %c0_i32 = arith.constant 0 : i32
    %c0_i32_0 = arith.constant 0 : i32
    %c0_i32_1 = arith.constant 0 : i32
    %c0_i32_2 = arith.constant 0 : i32
    return %c0_i32, %c0_i32_0, %c0_i32_1 : i32, i32, i32
  }
  func.func @transform_11(%arg0: i32) -> (i32, i32) {
    %c0_i32 = arith.constant 0 : i32
    %c0_i32_0 = arith.constant 0 : i32
    %c0_i32_1 = arith.constant 0 : i32
    return %c0_i32, %c0_i32_0 : i32, i32
  }
  func.func @transform_12(%arg0: i32) -> (i32, i32) {
    %c0_i32 = arith.constant 0 : i32
    %c0_i32_0 = arith.constant 0 : i32
    %c0_i32_1 = arith.constant 0 : i32
    return %c0_i32, %c0_i32_0 : i32, i32
  }
  func.func @transform_13(%arg0: i32) -> (i32, i32, i32) {
    %c0_i32 = arith.constant 0 : i32
    %c0_i32_0 = arith.constant 0 : i32
    %c0_i32_1 = arith.constant 0 : i32
    %c0_i32_2 = arith.constant 0 : i32
    return %c0_i32, %c0_i32_0, %c0_i32_1 : i32, i32, i32
  }
}

</mosaic_0001>

<llo_original>
// kernel: tpu_custom_call.1
$region0: #{tpu_custom_call.1}
  #allocation0 [shape = 'u32[]', space=smem, size = 0x4, offset = 0x4, fixed_abs, tag = 'smem constant byte address 0x4 - core index']
  #allocation1 [shape = 'u32[72,128]{1,0:T(1,128)}', space=vmem, size = 0x9000, scoped, tag = 'internal scratch']
  #allocation2 [shape = 'f32[1,1]{1,0:T(1,128)S(1)}', space=vmem, size = 0x200, scoped, tag = 'scoped memory for tpu_custom_call.1']
  %s0 = inlined_call_operand.vmem [shape: f32[32,8], index: 0, kind: input, shape index: {}]
  %s1 = inlined_call_operand.vmem [shape: f32[32,32], index: 1, kind: input, shape index: {}]
  %s2 = inlined_call_operand.vmem [shape: f32[16,4], index: 2, kind: input, shape index: {}]
  %s3 = inlined_call_operand.vmem [shape: s32[48,1], index: 3, kind: input, shape index: {}]
  %s4 = inlined_call_operand.vmem [shape: f32[8,32], index: 4, kind: input, shape index: {}]
  %s5 = inlined_call_operand.vmem [shape: f32[1,32], index: 5, kind: input, shape index: {}]
  %s6 = inlined_call_operand.vmem [shape: f32[32,4], index: 6, kind: input, shape index: {}]
  %s7 = inlined_call_operand.vmem [shape: f32[1,4], index: 7, kind: input, shape index: {}]
  %s8 = inlined_call_operand.vmem [shape: f32[4,1], index: 8, kind: input, shape index: {}]
  %s9 = inlined_call_operand.<no memory space> [shape: f32[1,1], index: 9, kind: input, shape index: {}]
  %s10 = inlined_call_operand.vmem [shape: f32[3,4,4], index: 10, kind: input, shape index: {}]
  %s11 = inlined_call_operand.vmem [shape: f32[4,4], index: 11, kind: input, shape index: {}]
  %s12 = inlined_call_operand.vmem [shape: f32[1,4], index: 12, kind: input, shape index: {}]
  %s13 = inlined_call_operand.vmem [shape: f32[2,8,4], index: 13, kind: output, shape index: {}]
  %s14 = sld [smem:[#allocation0]]
  $region62: #{tpu_custom_call.1} parent=0
    _
  %s16 = ssub.s32 1, %s14
  %s17 = scalar_select 0, %s16, %s14
  %v18 = vstv %s9
  %19 = vst [vmem:[#allocation2] sm:$0x1] %v18
  // Predicated region
  $region2: #{tpu_custom_call.1} parent=0 // pred_check
    _
  $region3: #{tpu_custom_call.1} parent=0 // pred_check_branch
    %21 = sbr.rel (0) target = $region5
  $region4: #{tpu_custom_call.1} parent=0 // pred_region
    _
  $region5: #{tpu_custom_call.1} parent=0 // pred_fallthru
    _
  // Predicated region
  $region6: #{tpu_custom_call.1} parent=0 // pred_check
    _
  $region7: #{tpu_custom_call.1} parent=0 // pred_check_branch
    %23 = sbr.rel (0) target = $region9
  $region8: #{tpu_custom_call.1} parent=0 // pred_region
    _
  $region9: #{tpu_custom_call.1} parent=0 // pred_fallthru
    _
  // Predicated region
  $region10: #{tpu_custom_call.1} parent=0 // pred_check
    _
  $region11: #{tpu_custom_call.1} parent=0 // pred_check_branch
    %25 = sbr.rel (0) target = $region13
  $region12: #{tpu_custom_call.1} parent=0 // pred_region
    _
  $region13: #{tpu_custom_call.1} parent=0 // pred_fallthru
    _
  // Predicated region
  $region14: #{tpu_custom_call.1} parent=0 // pred_check
    _
  $region15: #{tpu_custom_call.1} parent=0 // pred_check_branch
    %27 = sbr.rel (0) target = $region17
  $region16: #{tpu_custom_call.1} parent=0 // pred_region
    _
  $region17: #{tpu_custom_call.1} parent=0 // pred_fallthru
    _
  // Predicated region
  $region18: #{tpu_custom_call.1} parent=0 // pred_check
    _
  $region19: #{tpu_custom_call.1} parent=0 // pred_check_branch
    %29 = sbr.rel (0) target = $region21
  $region20: #{tpu_custom_call.1} parent=0 // pred_region
    _
  $region21: #{tpu_custom_call.1} parent=0 // pred_fallthru
    _
  // Predicated region
  $region22: #{tpu_custom_call.1} parent=0 // pred_check
    _
  $region23: #{tpu_custom_call.1} parent=0 // pred_check_branch
    %31 = sbr.rel (0) target = $region25
  $region24: #{tpu_custom_call.1} parent=0 // pred_region
    _
  $region25: #{tpu_custom_call.1} parent=0 // pred_fallthru
    _
  // Predicated region
  $region26: #{tpu_custom_call.1} parent=0 // pred_check
    _
  $region27: #{tpu_custom_call.1} parent=0 // pred_check_branch
    %33 = sbr.rel (0) target = $region29
  $region28: #{tpu_custom_call.1} parent=0 // pred_region
    _
  $region29: #{tpu_custom_call.1} parent=0 // pred_fallthru
    _
  // Predicated region
  $region30: #{tpu_custom_call.1} parent=0 // pred_check
    _
  $region31: #{tpu_custom_call.1} parent=0 // pred_check_branch
    %35 = sbr.rel (0) target = $region33
  $region32: #{tpu_custom_call.1} parent=0 // pred_region
    _
  $region33: #{tpu_custom_call.1} parent=0 // pred_fallthru
    _
  // Predicated region
  $region34: #{tpu_custom_call.1} parent=0 // pred_check
    _
  $region35: #{tpu_custom_call.1} parent=0 // pred_check_branch
    %37 = sbr.rel (0) target = $region37
  $region36: #{tpu_custom_call.1} parent=0 // pred_region
    _
  $region37: #{tpu_custom_call.1} parent=0 // pred_fallthru
    _
  // Predicated region
  $region38: #{tpu_custom_call.1} parent=0 // pred_check
    _
  $region39: #{tpu_custom_call.1} parent=0 // pred_check_branch
    %39 = sbr.rel (0) target = $region41
  $region40: #{tpu_custom_call.1} parent=0 // pred_region
    _
  $region41: #{tpu_custom_call.1} parent=0 // pred_fallthru
    _
  // Predicated region
  $region42: #{tpu_custom_call.1} parent=0 // pred_check
    _
  $region43: #{tpu_custom_call.1} parent=0 // pred_check_branch
    %41 = sbr.rel (0) target = $region45
  $region44: #{tpu_custom_call.1} parent=0 // pred_region
    _
  $region45: #{tpu_custom_call.1} parent=0 // pred_fallthru
    _
  // Predicated region
  $region46: #{tpu_custom_call.1} parent=0 // pred_check
    _
  $region47: #{tpu_custom_call.1} parent=0 // pred_check_branch
    %43 = sbr.rel (0) target = $region49
  $region48: #{tpu_custom_call.1} parent=0 // pred_region
    _
  $region49: #{tpu_custom_call.1} parent=0 // pred_fallthru
    _
  // Predicated region
  $region50: #{tpu_custom_call.1} parent=0 // pred_check
    _
  $region51: #{tpu_custom_call.1} parent=0 // pred_check_branch
    %45 = sbr.rel (0) target = $region53
  $region52: #{tpu_custom_call.1} parent=0 // pred_region
    _
  $region53: #{tpu_custom_call.1} parent=0 // pred_fallthru
    _
  %v46 = vld [vmem:[%s0] sm:$0xff]
  %v47 = vld [vmem:[%s0 + $0x8] sm:$0xff]
  %v48 = vld [vmem:[%s0 + $0x10] sm:$0xff]
  %v49 = vld [vmem:[%s0 + $0x18] sm:$0xff]
  %v50 = vld [vmem:[%s1] sm:$0xff]
  %v51 = vld [vmem:[%s1 + $0x8] sm:$0xff]
  %v52 = vld [vmem:[%s1 + $0x10] sm:$0xff]
  %v53 = vld [vmem:[%s1 + $0x18] sm:$0xff]
  %v54 = vld [vmem:[%s4] sm:$0xff]
  %v55 = vld [vmem:[%s5] sm:$0x1]
  %v57 = vperm.slane %v55, 0
  %vm59 = vcmask 64512
  %v61 = vsel %vm59, %v46, 0
  %v64 = vsel %vm59, %v47, 0
  %v67 = vsel %vm59, %v48, 0
  %v70 = vsel %vm59, %v49, 0
  %72 = vmatpush.msra.mxu0 0.0
  %73 = vmatpush.msra.mxu0 0.0
  %74 = vmatpush.msra.mxu0 0.0
  %75 = vmatpush.msra.mxu0 0.0
  %76 = vmatpush.msra.mxu0 0.0
  %77 = vmatpush.msra.mxu0 0.0
  %78 = vmatpush.msra.mxu0 0.0
  %79 = vmatpush.msra.mxu0 0.0
  %80 = vmatpush.msra.mxu0 0.0
  %81 = vmatpush.msra.mxu0 0.0
  %82 = vmatpush.msra.mxu0 0.0
  %83 = vmatpush.msra.mxu0 0.0
  %84 = vmatpush.msra.mxu0 0.0
  %85 = vmatpush.msra.mxu0 0.0
  %86 = vmatpush.msra.mxu0 0.0
  %87 = vmatpush.msra.mxu0 %v54
  %88 = vmatmul.f32.gmra.mxu0 %v61
  %v89 = vpop.f32.mrf.mxu0
  %v90 = vadd.f32 %v57, %v89
  %91 = vmatmul.f32.gmra.mxu0 %v64
  %v92 = vpop.f32.mrf.mxu0
  %v93 = vadd.f32 %v57, %v92
  %94 = vmatmul.f32.gmra.mxu0 %v67
  %v95 = vpop.f32.mrf.mxu0
  %v96 = vadd.f32 %v57, %v95
  %97 = vmatmul.f32.gmra.mxu0 %v70
  %v98 = vpop.f32.mrf.mxu0
  %v99 = vadd.f32 %v57, %v98
  %100 = vdwg.mxu0
  %v101 = vmax.f32 %v90, 0.0
  %v102 = vmax.f32 %v93, 0.0
  %v103 = vmax.f32 %v96, 0.0
  %v104 = vmax.f32 %v99, 0.0
  %v105 = vld [vmem:[%s6] sm:$0xff]
  %v106 = vld [vmem:[%s6 + $0x8] sm:$0xff]
  %v107 = vld [vmem:[%s6 + $0x10] sm:$0xff]
  %v108 = vld [vmem:[%s6 + $0x18] sm:$0xff]
  %v109 = vld [vmem:[%s7] sm:$0x1]
  %v111 = vperm.slane %v109, 0
  %vm113 = vcmask 261120
  %v115 = vsel %vm113, %v101, 0
  %v118 = vsel %vm113, %v102, 0
  %v121 = vsel %vm113, %v103, 0
  %v124 = vsel %vm113, %v104, 0
  %126 = vmatpush.msra.mxu0 0.0
  %127 = vmatpush.msra.mxu0 0.0
  %128 = vmatpush.msra.mxu0 0.0
  %129 = vmatpush.msra.mxu0 0.0
  %130 = vmatpush.msra.mxu0 0.0
  %131 = vmatpush.msra.mxu0 0.0
  %132 = vmatpush.msra.mxu0 0.0
  %133 = vmatpush.msra.mxu0 0.0
  %134 = vmatpush.msra.mxu0 0.0
  %135 = vmatpush.msra.mxu0 0.0
  %136 = vmatpush.msra.mxu0 0.0
  %137 = vmatpush.msra.mxu0 0.0
  %138 = vmatpush.msra.mxu0 %v108
  %139 = vmatpush.msra.mxu0 %v107
  %140 = vmatpush.msra.mxu0 %v106
  %141 = vmatpush.msra.mxu0 %v105
  %142 = vmatmul.f32.gmra.mxu0 %v115
  %v143 = vpop.f32.mrf.mxu0
  %v144 = vadd.f32 %v111, %v143
  %145 = vmatmul.f32.gmra.mxu0 %v118
  %v146 = vpop.f32.mrf.mxu0
  %v147 = vadd.f32 %v111, %v146
  %148 = vmatmul.f32.gmra.mxu0 %v121
  %v149 = vpop.f32.mrf.mxu0
  %v150 = vadd.f32 %v111, %v149
  %151 = vmatmul.f32.gmra.mxu0 %v124
  %v152 = vpop.f32.mrf.mxu0
  %v153 = vadd.f32 %v111, %v152
  %154 = vdwg.mxu0
  %v156 = vsel %vm113, %v50, 0
  %v159 = vsel %vm113, %v51, 0
  %v162 = vsel %vm113, %v52, 0
  %v165 = vsel %vm113, %v53, 0
  %167 = vmatpush.msra.mxu0 0.0
  %168 = vmatpush.msra.mxu0 0.0
  %169 = vmatpush.msra.mxu0 0.0
  %170 = vmatpush.msra.mxu0 0.0
  %171 = vmatpush.msra.mxu0 0.0
  %172 = vmatpush.msra.mxu0 0.0
  %173 = vmatpush.msra.mxu0 0.0
  %174 = vmatpush.msra.mxu0 0.0
  %175 = vmatpush.msra.mxu0 0.0
  %176 = vmatpush.msra.mxu0 0.0
  %177 = vmatpush.msra.mxu0 0.0
  %178 = vmatpush.msra.mxu0 0.0
  %179 = vmatpush.msra.mxu0 %v153
  %180 = vmatpush.msra.mxu0 %v150
  %181 = vmatpush.msra.mxu0 %v147
  %182 = vmatpush.msra.mxu0 %v144
  %183 = vmatmul.f32.gmra.mxu0 %v156
  %v184 = vpop.f32.mrf.mxu0
  %v185 = vadd.f32 0.0, %v184
  %186 = vmatmul.f32.gmra.mxu0 %v159
  %v187 = vpop.f32.mrf.mxu0
  %v188 = vadd.f32 0.0, %v187
  %189 = vmatmul.f32.gmra.mxu0 %v162
  %v190 = vpop.f32.mrf.mxu0
  %v191 = vadd.f32 0.0, %v190
  %192 = vmatmul.f32.gmra.mxu0 %v165
  %v193 = vpop.f32.mrf.mxu0
  %v194 = vadd.f32 0.0, %v193
  %195 = vdwg.mxu0
  %196 = vmatpush.msra.mxu0 0.0
  %197 = vmatpush.msra.mxu0 0.0
  %198 = vmatpush.msra.mxu0 0.0
  %199 = vmatpush.msra.mxu0 0.0
  %200 = vmatpush.msra.mxu0 0.0
  %201 = vmatpush.msra.mxu0 0.0
  %202 = vmatpush.msra.mxu0 0.0
  %203 = vmatpush.msra.mxu0 0.0
  %204 = vmatpush.msra.mxu0 0.0
  %205 = vmatpush.msra.mxu0 0.0
  %206 = vmatpush.msra.mxu0 0.0
  %207 = vmatpush.msra.mxu0 0.0
  %208 = vmatpush.msra.mxu0 %v194
  %209 = vmatpush.msra.mxu0 %v191
  %210 = vmatpush.msra.mxu0 %v188
  %211 = vmatpush.msra.mxu0 %v185
  %212 = vmatmul.f32.gmra.mxu0 %v156
  %v213 = vpop.f32.mrf.mxu0
  %v214 = vadd.f32 0.0, %v213
  %215 = vmatmul.f32.gmra.mxu0 %v159
  %v216 = vpop.f32.mrf.mxu0
  %v217 = vadd.f32 0.0, %v216
  %218 = vmatmul.f32.gmra.mxu0 %v162
  %v219 = vpop.f32.mrf.mxu0
  %v220 = vadd.f32 0.0, %v219
  %221 = vmatmul.f32.gmra.mxu0 %v165
  %v222 = vpop.f32.mrf.mxu0
  %v223 = vadd.f32 0.0, %v222
  %224 = vdwg.mxu0
  %225 = vmatpush.msra.mxu0 0.0
  %226 = vmatpush.msra.mxu0 0.0
  %227 = vmatpush.msra.mxu0 0.0
  %228 = vmatpush.msra.mxu0 0.0
  %229 = vmatpush.msra.mxu0 0.0
  %230 = vmatpush.msra.mxu0 0.0
  %231 = vmatpush.msra.mxu0 0.0
  %232 = vmatpush.msra.mxu0 0.0
  %233 = vmatpush.msra.mxu0 0.0
  %234 = vmatpush.msra.mxu0 0.0
  %235 = vmatpush.msra.mxu0 0.0
  %236 = vmatpush.msra.mxu0 0.0
  %237 = vmatpush.msra.mxu0 %v223
  %238 = vmatpush.msra.mxu0 %v220
  %239 = vmatpush.msra.mxu0 %v217
  %240 = vmatpush.msra.mxu0 %v214
  %241 = vmatmul.f32.gmra.mxu0 %v156
  %v242 = vpop.f32.mrf.mxu0
  %v243 = vadd.f32 0.0, %v242
  %244 = vmatmul.f32.gmra.mxu0 %v159
  %v245 = vpop.f32.mrf.mxu0
  %v246 = vadd.f32 0.0, %v245
  %247 = vmatmul.f32.gmra.mxu0 %v162
  %v248 = vpop.f32.mrf.mxu0
  %v249 = vadd.f32 0.0, %v248
  %250 = vmatmul.f32.gmra.mxu0 %v165
  %v251 = vpop.f32.mrf.mxu0
  %v252 = vadd.f32 0.0, %v251
  %253 = vdwg.mxu0
  %v254 = vld [vmem:[%s8] sm:$0xf]
  %v255 = vld [vmem:[#allocation2] sm:$0x1]
  %v257 = vperm.slane %v255, 0
  %vm259 = vcmask 31744
  %v261 = vsel %vm259, %v144, 0
  %v264 = vsel %vm259, %v147, 0
  %v267 = vsel %vm259, %v150, 0
  %v270 = vsel %vm259, %v153, 0
  %v273 = vsel %vm259, %v185, 0
  %v276 = vsel %vm259, %v188, 0
  %v279 = vsel %vm259, %v191, 0
  %v282 = vsel %vm259, %v194, 0
  %v285 = vsel %vm259, %v214, 0
  %v288 = vsel %vm259, %v217, 0
  %v291 = vsel %vm259, %v220, 0
  %v294 = vsel %vm259, %v223, 0
  %v297 = vsel %vm259, %v243, 0
  %v300 = vsel %vm259, %v246, 0
  %v303 = vsel %vm259, %v249, 0
  %v306 = vsel %vm259, %v252, 0
  %vm308 = vcmask 1043456
  %v310 = vsel %vm308, %v254, 0
  %312 = vmatpush.msra.mxu0 0.0
  %313 = vmatpush.msra.mxu0 0.0
  %314 = vmatpush.msra.mxu0 0.0
  %315 = vmatpush.msra.mxu0 0.0
  %316 = vmatpush.msra.mxu0 0.0
  %317 = vmatpush.msra.mxu0 0.0
  %318 = vmatpush.msra.mxu0 0.0
  %319 = vmatpush.msra.mxu0 0.0
  %320 = vmatpush.msra.mxu0 0.0
  %321 = vmatpush.msra.mxu0 0.0
  %322 = vmatpush.msra.mxu0 0.0
  %323 = vmatpush.msra.mxu0 0.0
  %324 = vmatpush.msra.mxu0 0.0
  %325 = vmatpush.msra.mxu0 0.0
  %326 = vmatpush.msra.mxu0 0.0
  %327 = vmatpush.msra.mxu0 %v310
  %328 = vmatmul.f32.gmra.mxu0 %v261
  %v329 = vpop.f32.mrf.mxu0
  %v330 = vadd.f32 %v257, %v329
  %331 = vmatmul.f32.gmra.mxu0 %v264
  %v332 = vpop.f32.mrf.mxu0
  %v333 = vadd.f32 %v257, %v332
  %334 = vmatmul.f32.gmra.mxu0 %v267
  %v335 = vpop.f32.mrf.mxu0
  %v336 = vadd.f32 %v257, %v335
  %337 = vmatmul.f32.gmra.mxu0 %v270
  %v338 = vpop.f32.mrf.mxu0
  %v339 = vadd.f32 %v257, %v338
  %340 = vmatmul.f32.gmra.mxu0 %v273
  %v341 = vpop.f32.mrf.mxu0
  %v342 = vadd.f32 %v257, %v341
  %343 = vmatmul.f32.gmra.mxu0 %v276
  %v344 = vpop.f32.mrf.mxu0
  %v345 = vadd.f32 %v257, %v344
  %346 = vmatmul.f32.gmra.mxu0 %v279
  %v347 = vpop.f32.mrf.mxu0
  %v348 = vadd.f32 %v257, %v347
  %349 = vmatmul.f32.gmra.mxu0 %v282
  %v350 = vpop.f32.mrf.mxu0
  %v351 = vadd.f32 %v257, %v350
  %352 = vmatmul.f32.gmra.mxu0 %v285
  %v353 = vpop.f32.mrf.mxu0
  %v354 = vadd.f32 %v257, %v353
  %355 = vmatmul.f32.gmra.mxu0 %v288
  %v356 = vpop.f32.mrf.mxu0
  %v357 = vadd.f32 %v257, %v356
  %358 = vmatmul.f32.gmra.mxu0 %v291
  %v359 = vpop.f32.mrf.mxu0
  %v360 = vadd.f32 %v257, %v359
  %361 = vmatmul.f32.gmra.mxu0 %v294
  %v362 = vpop.f32.mrf.mxu0
  %v363 = vadd.f32 %v257, %v362
  %364 = vmatmul.f32.gmra.mxu0 %v297
  %v365 = vpop.f32.mrf.mxu0
  %v366 = vadd.f32 %v257, %v365
  %367 = vmatmul.f32.gmra.mxu0 %v300
  %v368 = vpop.f32.mrf.mxu0
  %v369 = vadd.f32 %v257, %v368
  %370 = vmatmul.f32.gmra.mxu0 %v303
  %v371 = vpop.f32.mrf.mxu0
  %v372 = vadd.f32 %v257, %v371
  %373 = vmatmul.f32.gmra.mxu0 %v306
  %v374 = vpop.f32.mrf.mxu0
  %v375 = vadd.f32 %v257, %v374
  %376 = vdwg.mxu0
  %v377 = vxor.u32 %v330, 2147483648
  %v378 = vxor.u32 %v333, 2147483648
  %v379 = vxor.u32 %v336, 2147483648
  %v380 = vxor.u32 %v339, 2147483648
  %v381 = vxor.u32 %v342, 2147483648
  %v382 = vxor.u32 %v345, 2147483648
  %v383 = vxor.u32 %v348, 2147483648
  %v384 = vxor.u32 %v351, 2147483648
  %v385 = vxor.u32 %v354, 2147483648
  %v386 = vxor.u32 %v357, 2147483648
  %v387 = vxor.u32 %v360, 2147483648
  %v388 = vxor.u32 %v363, 2147483648
  %v389 = vxor.u32 %v366, 2147483648
  %v390 = vxor.u32 %v369, 2147483648
  %v391 = vxor.u32 %v372, 2147483648
  %v392 = vxor.u32 %v375, 2147483648
  %v393 = vmul.f32 %v377, 1.442695
  %v394 = vpow.pop %v393
  %v395 = vmul.f32 %v378, 1.442695
  %v396 = vpow.pop %v395
  %v397 = vmul.f32 %v379, 1.442695
  %v398 = vpow.pop %v397
  %v399 = vmul.f32 %v380, 1.442695
  %v400 = vpow.pop %v399
  %v401 = vmul.f32 %v381, 1.442695
  %v402 = vpow.pop %v401
  %v403 = vmul.f32 %v382, 1.442695
  %v404 = vpow.pop %v403
  %v405 = vmul.f32 %v383, 1.442695
  %v406 = vpow.pop %v405
  %v407 = vmul.f32 %v384, 1.442695
  %v408 = vpow.pop %v407
  %v409 = vmul.f32 %v385, 1.442695
  %v410 = vpow.pop %v409
  %v411 = vmul.f32 %v386, 1.442695
  %v412 = vpow.pop %v411
  %v413 = vmul.f32 %v387, 1.442695
  %v414 = vpow.pop %v413
  %v415 = vmul.f32 %v388, 1.442695
  %v416 = vpow.pop %v415
  %v417 = vmul.f32 %v389, 1.442695
  %v418 = vpow.pop %v417
  %v419 = vmul.f32 %v390, 1.442695
  %v420 = vpow.pop %v419
  %v421 = vmul.f32 %v391, 1.442695
  %v422 = vpow.pop %v421
  %v423 = vmul.f32 %v392, 1.442695
  %v424 = vpow.pop %v423
  %v425 = vadd.f32 %v394, 1.0
  %v426 = vadd.f32 %v396, 1.0
  %v427 = vadd.f32 %v398, 1.0
  %v428 = vadd.f32 %v400, 1.0
  %v429 = vadd.f32 %v402, 1.0
  %v430 = vadd.f32 %v404, 1.0
  %v431 = vadd.f32 %v406, 1.0
  %v432 = vadd.f32 %v408, 1.0
  %v433 = vadd.f32 %v410, 1.0
  %v434 = vadd.f32 %v412, 1.0
  %v435 = vadd.f32 %v414, 1.0
  %v436 = vadd.f32 %v416, 1.0
  %v437 = vadd.f32 %v418, 1.0
  %v438 = vadd.f32 %v420, 1.0
  %v439 = vadd.f32 %v422, 1.0
  %v440 = vadd.f32 %v424, 1.0
  %v441 = vrcp.pop %v425
  %v442 = vmul.f32 %v425, %v441
  %v443 = vsub.f32 1.0, %v442
  %v444 = vmul.f32 %v441, %v443
  %v445 = vadd.f32 %v441, %v444
  %vm446 = vweird.f32 %v425
  %vm447 = vweird.f32 %v441
  %vm448 = vmor %vm446, %vm447
  %v449 = vsel %vm448, %v441, %v445
  %v450 = vand.u32 2147483647, %v425
  %vm451 = vcmp.eq.f32.partialorder %v450, 8.507059e+37
  %v452 = vand.u32 %v425, 2147483648
  %v453 = vor.u32 1.1754944e-38, %v452
  %v454 = vsel %vm451, %v453, %v449
  %v455 = vmul.f32 1.0, %v454
  %v456 = vrcp.pop %v426
  %v457 = vmul.f32 %v426, %v456
  %v458 = vsub.f32 1.0, %v457
  %v459 = vmul.f32 %v456, %v458
  %v460 = vadd.f32 %v456, %v459
  %vm461 = vweird.f32 %v426
  %vm462 = vweird.f32 %v456
  %vm463 = vmor %vm461, %vm462
  %v464 = vsel %vm463, %v456, %v460
  %v465 = vand.u32 2147483647, %v426
  %vm466 = vcmp.eq.f32.partialorder %v465, 8.507059e+37
  %v467 = vand.u32 %v426, 2147483648
  %v468 = vor.u32 1.1754944e-38, %v467
  %v469 = vsel %vm466, %v468, %v464
  %v470 = vmul.f32 1.0, %v469
  %v471 = vrcp.pop %v427
  %v472 = vmul.f32 %v427, %v471
  %v473 = vsub.f32 1.0, %v472
  %v474 = vmul.f32 %v471, %v473
  %v475 = vadd.f32 %v471, %v474
  %vm476 = vweird.f32 %v427
  %vm477 = vweird.f32 %v471
  %vm478 = vmor %vm476, %vm477
  %v479 = vsel %vm478, %v471, %v475
  %v480 = vand.u32 2147483647, %v427
  %vm481 = vcmp.eq.f32.partialorder %v480, 8.507059e+37
  %v482 = vand.u32 %v427, 2147483648
  %v483 = vor.u32 1.1754944e-38, %v482
  %v484 = vsel %vm481, %v483, %v479
  %v485 = vmul.f32 1.0, %v484
  %v486 = vrcp.pop %v428
  %v487 = vmul.f32 %v428, %v486
  %v488 = vsub.f32 1.0, %v487
  %v489 = vmul.f32 %v486, %v488
  %v490 = vadd.f32 %v486, %v489
  %vm491 = vweird.f32 %v428
  %vm492 = vweird.f32 %v486
  %vm493 = vmor %vm491, %vm492
  %v494 = vsel %vm493, %v486, %v490
  %v495 = vand.u32 2147483647, %v428
  %vm496 = vcmp.eq.f32.partialorder %v495, 8.507059e+37
  %v497 = vand.u32 %v428, 2147483648
  %v498 = vor.u32 1.1754944e-38, %v497
  %v499 = vsel %vm496, %v498, %v494
  %v500 = vmul.f32 1.0, %v499
  %v501 = vrcp.pop %v429
  %v502 = vmul.f32 %v429, %v501
  %v503 = vsub.f32 1.0, %v502
  %v504 = vmul.f32 %v501, %v503
  %v505 = vadd.f32 %v501, %v504
  %vm506 = vweird.f32 %v429
  %vm507 = vweird.f32 %v501
  %vm508 = vmor %vm506, %vm507
  %v509 = vsel %vm508, %v501, %v505
  %v510 = vand.u32 2147483647, %v429
  %vm511 = vcmp.eq.f32.partialorder %v510, 8.507059e+37
  %v512 = vand.u32 %v429, 2147483648
  %v513 = vor.u32 1.1754944e-38, %v512
  %v514 = vsel %vm511, %v513, %v509
  %v515 = vmul.f32 1.0, %v514
  %v516 = vrcp.pop %v430
  %v517 = vmul.f32 %v430, %v516
  %v518 = vsub.f32 1.0, %v517
  %v519 = vmul.f32 %v516, %v518
  %v520 = vadd.f32 %v516, %v519
  %vm521 = vweird.f32 %v430
  %vm522 = vweird.f32 %v516
  %vm523 = vmor %vm521, %vm522
  %v524 = vsel %vm523, %v516, %v520
  %v525 = vand.u32 2147483647, %v430
  %vm526 = vcmp.eq.f32.partialorder %v525, 8.507059e+37
  %v527 = vand.u32 %v430, 2147483648
  %v528 = vor.u32 1.1754944e-38, %v527
  %v529 = vsel %vm526, %v528, %v524
  %v530 = vmul.f32 1.0, %v529
  %v531 = vrcp.pop %v431
  %v532 = vmul.f32 %v431, %v531
  %v533 = vsub.f32 1.0, %v532
  %v534 = vmul.f32 %v531, %v533
  %v535 = vadd.f32 %v531, %v534
  %vm536 = vweird.f32 %v431
  %vm537 = vweird.f32 %v531
  %vm538 = vmor %vm536, %vm537
  %v539 = vsel %vm538, %v531, %v535
  %v540 = vand.u32 2147483647, %v431
  %vm541 = vcmp.eq.f32.partialorder %v540, 8.507059e+37
  %v542 = vand.u32 %v431, 2147483648
  %v543 = vor.u32 1.1754944e-38, %v542
  %v544 = vsel %vm541, %v543, %v539
  %v545 = vmul.f32 1.0, %v544
  %v546 = vrcp.pop %v432
  %v547 = vmul.f32 %v432, %v546
  %v548 = vsub.f32 1.0, %v547
  %v549 = vmul.f32 %v546, %v548
  %v550 = vadd.f32 %v546, %v549
  %vm551 = vweird.f32 %v432
  %vm552 = vweird.f32 %v546
  %vm553 = vmor %vm551, %vm552
  %v554 = vsel %vm553, %v546, %v550
  %v555 = vand.u32 2147483647, %v432
  %vm556 = vcmp.eq.f32.partialorder %v555, 8.507059e+37
  %v557 = vand.u32 %v432, 2147483648
  %v558 = vor.u32 1.1754944e-38, %v557
  %v559 = vsel %vm556, %v558, %v554
  %v560 = vmul.f32 1.0, %v559
  %v561 = vrcp.pop %v433
  %v562 = vmul.f32 %v433, %v561
  %v563 = vsub.f32 1.0, %v562
  %v564 = vmul.f32 %v561, %v563
  %v565 = vadd.f32 %v561, %v564
  %vm566 = vweird.f32 %v433
  %vm567 = vweird.f32 %v561
  %vm568 = vmor %vm566, %vm567
  %v569 = vsel %vm568, %v561, %v565
  %v570 = vand.u32 2147483647, %v433
  %vm571 = vcmp.eq.f32.partialorder %v570, 8.507059e+37
  %v572 = vand.u32 %v433, 2147483648
  %v573 = vor.u32 1.1754944e-38, %v572
  %v574 = vsel %vm571, %v573, %v569
  %v575 = vmul.f32 1.0, %v574
  %v576 = vrcp.pop %v434
  %v577 = vmul.f32 %v434, %v576
  %v578 = vsub.f32 1.0, %v577
  %v579 = vmul.f32 %v576, %v578
  %v580 = vadd.f32 %v576, %v579
  %vm581 = vweird.f32 %v434
  %vm582 = vweird.f32 %v576
  %vm583 = vmor %vm581, %vm582
  %v584 = vsel %vm583, %v576, %v580
  %v585 = vand.u32 2147483647, %v434
  %vm586 = vcmp.eq.f32.partialorder %v585, 8.507059e+37
  %v587 = vand.u32 %v434, 2147483648
  %v588 = vor.u32 1.1754944e-38, %v587
  %v589 = vsel %vm586, %v588, %v584
  %v590 = vmul.f32 1.0, %v589
  %v591 = vrcp.pop %v435
  %v592 = vmul.f32 %v435, %v591
  %v593 = vsub.f32 1.0, %v592
  %v594 = vmul.f32 %v591, %v593
  %v595 = vadd.f32 %v591, %v594
  %vm596 = vweird.f32 %v435
  %vm597 = vweird.f32 %v591
  %vm598 = vmor %vm596, %vm597
  %v599 = vsel %vm598, %v591, %v595
  %v600 = vand.u32 2147483647, %v435
  %vm601 = vcmp.eq.f32.partialorder %v600, 8.507059e+37
  %v602 = vand.u32 %v435, 2147483648
  %v603 = vor.u32 1.1754944e-38, %v602
  %v604 = vsel %vm601, %v603, %v599
  %v605 = vmul.f32 1.0, %v604
  %v606 = vrcp.pop %v436
  %v607 = vmul.f32 %v436, %v606
  %v608 = vsub.f32 1.0, %v607
  %v609 = vmul.f32 %v606, %v608
  %v610 = vadd.f32 %v606, %v609
  %vm611 = vweird.f32 %v436
  %vm612 = vweird.f32 %v606
  %vm613 = vmor %vm611, %vm612
  %v614 = vsel %vm613, %v606, %v610
  %v615 = vand.u32 2147483647, %v436
  %vm616 = vcmp.eq.f32.partialorder %v615, 8.507059e+37
  %v617 = vand.u32 %v436, 2147483648
  %v618 = vor.u32 1.1754944e-38, %v617
  %v619 = vsel %vm616, %v618, %v614
  %v620 = vmul.f32 1.0, %v619
  %v621 = vrcp.pop %v437
  %v622 = vmul.f32 %v437, %v621
  %v623 = vsub.f32 1.0, %v622
  %v624 = vmul.f32 %v621, %v623
  %v625 = vadd.f32 %v621, %v624
  %vm626 = vweird.f32 %v437
  %vm627 = vweird.f32 %v621
  %vm628 = vmor %vm626, %vm627
  %v629 = vsel %vm628, %v621, %v625
  %v630 = vand.u32 2147483647, %v437
  %vm631 = vcmp.eq.f32.partialorder %v630, 8.507059e+37
  %v632 = vand.u32 %v437, 2147483648
  %v633 = vor.u32 1.1754944e-38, %v632
  %v634 = vsel %vm631, %v633, %v629
  %v635 = vmul.f32 1.0, %v634
  %v636 = vrcp.pop %v438
  %v637 = vmul.f32 %v438, %v636
  %v638 = vsub.f32 1.0, %v637
  %v639 = vmul.f32 %v636, %v638
  %v640 = vadd.f32 %v636, %v639
  %vm641 = vweird.f32 %v438
  %vm642 = vweird.f32 %v636
  %vm643 = vmor %vm641, %vm642
  %v644 = vsel %vm643, %v636, %v640
  %v645 = vand.u32 2147483647, %v438
  %vm646 = vcmp.eq.f32.partialorder %v645, 8.507059e+37
  %v647 = vand.u32 %v438, 2147483648
  %v648 = vor.u32 1.1754944e-38, %v647
  %v649 = vsel %vm646, %v648, %v644
  %v650 = vmul.f32 1.0, %v649
  %v651 = vrcp.pop %v439
  %v652 = vmul.f32 %v439, %v651
  %v653 = vsub.f32 1.0, %v652
  %v654 = vmul.f32 %v651, %v653
  %v655 = vadd.f32 %v651, %v654
  %vm656 = vweird.f32 %v439
  %vm657 = vweird.f32 %v651
  %vm658 = vmor %vm656, %vm657
  %v659 = vsel %vm658, %v651, %v655
  %v660 = vand.u32 2147483647, %v439
  %vm661 = vcmp.eq.f32.partialorder %v660, 8.507059e+37
  %v662 = vand.u32 %v439, 2147483648
  %v663 = vor.u32 1.1754944e-38, %v662
  %v664 = vsel %vm661, %v663, %v659
  %v665 = vmul.f32 1.0, %v664
  %v666 = vrcp.pop %v440
  %v667 = vmul.f32 %v440, %v666
  %v668 = vsub.f32 1.0, %v667
  %v669 = vmul.f32 %v666, %v668
  %v670 = vadd.f32 %v666, %v669
  %vm671 = vweird.f32 %v440
  %vm672 = vweird.f32 %v666
  %vm673 = vmor %vm671, %vm672
  %v674 = vsel %vm673, %v666, %v670
  %v675 = vand.u32 2147483647, %v440
  %vm676 = vcmp.eq.f32.partialorder %v675, 8.507059e+37
  %v677 = vand.u32 %v440, 2147483648
  %v678 = vor.u32 1.1754944e-38, %v677
  %v679 = vsel %vm676, %v678, %v674
  %v680 = vmul.f32 1.0, %v679
  %682 = vset.pattern.permute.xlu0 0
  %683 = vperm.xlu0 %682, %v455
  %v684 = vpop.permute.xlu0 %683
  %687 = vset.pattern.permute.xlu0 0
  %688 = vperm.xlu0 %687, %v470
  %v689 = vpop.permute.xlu0 %688
  %692 = vset.pattern.permute.xlu0 0
  %693 = vperm.xlu0 %692, %v485
  %v694 = vpop.permute.xlu0 %693
  %697 = vset.pattern.permute.xlu0 0
  %698 = vperm.xlu0 %697, %v500
  %v699 = vpop.permute.xlu0 %698
  %702 = vset.pattern.permute.xlu0 0
  %703 = vperm.xlu0 %702, %v515
  %v704 = vpop.permute.xlu0 %703
  %707 = vset.pattern.permute.xlu0 0
  %708 = vperm.xlu0 %707, %v530
  %v709 = vpop.permute.xlu0 %708
  %712 = vset.pattern.permute.xlu0 0
  %713 = vperm.xlu0 %712, %v545
  %v714 = vpop.permute.xlu0 %713
  %717 = vset.pattern.permute.xlu0 0
  %718 = vperm.xlu0 %717, %v560
  %v719 = vpop.permute.xlu0 %718
  %722 = vset.pattern.permute.xlu0 0
  %723 = vperm.xlu0 %722, %v575
  %v724 = vpop.permute.xlu0 %723
  %727 = vset.pattern.permute.xlu0 0
  %728 = vperm.xlu0 %727, %v590
  %v729 = vpop.permute.xlu0 %728
  %732 = vset.pattern.permute.xlu0 0
  %733 = vperm.xlu0 %732, %v605
  %v734 = vpop.permute.xlu0 %733
  %737 = vset.pattern.permute.xlu0 0
  %738 = vperm.xlu0 %737, %v620
  %v739 = vpop.permute.xlu0 %738
  %742 = vset.pattern.permute.xlu0 0
  %743 = vperm.xlu0 %742, %v635
  %v744 = vpop.permute.xlu0 %743
  %747 = vset.pattern.permute.xlu0 0
  %748 = vperm.xlu0 %747, %v650
  %v749 = vpop.permute.xlu0 %748
  %752 = vset.pattern.permute.xlu0 0
  %753 = vperm.xlu0 %752, %v665
  %v754 = vpop.permute.xlu0 %753
  %757 = vset.pattern.permute.xlu0 0
  %758 = vperm.xlu0 %757, %v680
  %v759 = vpop.permute.xlu0 %758
  %v761 = vmul.f32 %v684, %v144
  %v762 = vmul.f32 %v689, %v147
  %v763 = vmul.f32 %v694, %v150
  %v764 = vmul.f32 %v699, %v153
  %v765 = vmul.f32 %v704, %v185
  %v766 = vmul.f32 %v709, %v188
  %v767 = vmul.f32 %v714, %v191
  %v768 = vmul.f32 %v719, %v194
  %v769 = vmul.f32 %v724, %v214
  %v770 = vmul.f32 %v729, %v217
  %v771 = vmul.f32 %v734, %v220
  %v772 = vmul.f32 %v739, %v223
  %v773 = vmul.f32 %v744, %v243
  %v774 = vmul.f32 %v749, %v246
  %v775 = vmul.f32 %v754, %v249
  %v776 = vmul.f32 %v759, %v252
  %v777 = vadd.f32 %v761, %v765
  %v778 = vadd.f32 %v762, %v766
  %v779 = vadd.f32 %v763, %v767
  %v780 = vadd.f32 %v764, %v768
  %v781 = vadd.f32 %v777, %v769
  %v782 = vadd.f32 %v778, %v770
  %v783 = vadd.f32 %v779, %v771
  %v784 = vadd.f32 %v780, %v772
  %v785 = vadd.f32 %v781, %v773
  %v786 = vadd.f32 %v782, %v774
  %v787 = vadd.f32 %v783, %v775
  %v788 = vadd.f32 %v784, %v776
  %v789 = vld [vmem:[%s3] sm:$0xff]
  %v790 = vld [vmem:[%s3 + $0x8] sm:$0xff]
  %v791 = vld [vmem:[%s3 + $0x10] sm:$0xff]
  %v792 = vld [vmem:[%s3 + $0x18] sm:$0xff]
  %v793 = vld [vmem:[%s3 + $0x20] sm:$0xff]
  %v794 = vld [vmem:[%s3 + $0x28] sm:$0xff]
  %v795 = vlaneseq
  %v796 = vand.u32 %v795, 127
  %797 = vset.pattern.permute.xlu0 0
  %798 = vperm.xlu0 %797, %v789
  %v799 = vpop.permute.xlu0 %798
  %800 = vset.pattern.permute.xlu0 0
  %801 = vperm.xlu0 %800, %v790
  %v802 = vpop.permute.xlu0 %801
  %803 = vset.pattern.permute.xlu0 0
  %804 = vperm.xlu0 %803, %v791
  %v805 = vpop.permute.xlu0 %804
  %806 = vset.pattern.permute.xlu0 0
  %807 = vperm.xlu0 %806, %v792
  %v808 = vpop.permute.xlu0 %807
  %809 = vset.pattern.permute.xlu0 0
  %810 = vperm.xlu0 %809, %v793
  %v811 = vpop.permute.xlu0 %810
  %812 = vset.pattern.permute.xlu0 0
  %813 = vperm.xlu0 %812, %v794
  %v814 = vpop.permute.xlu0 %813
  %vm815 = vcmp.eq.s32.totalorder %v796, %v799
  %vm816 = vcmp.eq.s32.totalorder %v796, %v802
  %vm817 = vcmp.eq.s32.totalorder %v796, %v805
  %vm818 = vcmp.eq.s32.totalorder %v796, %v808
  %vm819 = vcmp.eq.s32.totalorder %v796, %v811
  %vm820 = vcmp.eq.s32.totalorder %v796, %v814
  %v821 = vsel %vm815, 1, 0
  %v822 = vsel %vm816, 1, 0
  %v823 = vsel %vm817, 1, 0
  %v824 = vsel %vm818, 1, 0
  %v825 = vsel %vm819, 1, 0
  %v826 = vsel %vm820, 1, 0
  %v827 = vcvt.s32.f32 %v821
  %v828 = vcvt.s32.f32 %v822
  %v829 = vcvt.s32.f32 %v823
  %v830 = vcvt.s32.f32 %v824
  %v831 = vcvt.s32.f32 %v825
  %v832 = vcvt.s32.f32 %v826
  %v834 = vsel %vm113, %v827, 0
  %v837 = vsel %vm113, %v828, 0
  %v840 = vsel %vm113, %v829, 0
  %v843 = vsel %vm113, %v830, 0
  %v846 = vsel %vm113, %v831, 0
  %v849 = vsel %vm113, %v832, 0
  %851 = vmatpush.msra.mxu0 0.0
  %852 = vmatpush.msra.mxu0 0.0
  %853 = vmatpush.msra.mxu0 0.0
  %854 = vmatpush.msra.mxu0 0.0
  %855 = vmatpush.msra.mxu0 0.0
  %856 = vmatpush.msra.mxu0 0.0
  %857 = vmatpush.msra.mxu0 0.0
  %858 = vmatpush.msra.mxu0 0.0
  %859 = vmatpush.msra.mxu0 0.0
  %860 = vmatpush.msra.mxu0 0.0
  %861 = vmatpush.msra.mxu0 0.0
  %862 = vmatpush.msra.mxu0 0.0
  %863 = vmatpush.msra.mxu0 %v788
  %864 = vmatpush.msra.mxu0 %v787
  %865 = vmatpush.msra.mxu0 %v786
  %866 = vmatpush.msra.mxu0 %v785
  %867 = vmatmul.f32.gmra.mxu0 %v834
  %v868 = vpop.f32.mrf.mxu0
  %v869 = vadd.f32 0.0, %v868
  %870 = vmatmul.f32.gmra.mxu0 %v837
  %v871 = vpop.f32.mrf.mxu0
  %v872 = vadd.f32 0.0, %v871
  %873 = vmatmul.f32.gmra.mxu0 %v840
  %v874 = vpop.f32.mrf.mxu0
  %v875 = vadd.f32 0.0, %v874
  %876 = vmatmul.f32.gmra.mxu0 %v843
  %v877 = vpop.f32.mrf.mxu0
  %v878 = vadd.f32 0.0, %v877
  %879 = vmatmul.f32.gmra.mxu0 %v846
  %v880 = vpop.f32.mrf.mxu0
  %v881 = vadd.f32 0.0, %v880
  %882 = vmatmul.f32.gmra.mxu0 %v849
  %v883 = vpop.f32.mrf.mxu0
  %v884 = vadd.f32 0.0, %v883
  %885 = vdwg.mxu0
  %v886 = vld [vmem:[%s10] sm:$0xf]
  %s887 = scalar_lea.vmem %s10, 4
  %v888 = vld [vmem:[%s887] sm:$0xf]
  %v890 = vsel %vm259, %v875, 0
  %v893 = vsel %vm259, %v878, 0
  %v896 = vsel %vm308, %v888, 0
  %898 = vmatpush.msra.mxu0 0.0
  %899 = vmatpush.msra.mxu0 0.0
  %900 = vmatpush.msra.mxu0 0.0
  %901 = vmatpush.msra.mxu0 0.0
  %902 = vmatpush.msra.mxu0 0.0
  %903 = vmatpush.msra.mxu0 0.0
  %904 = vmatpush.msra.mxu0 0.0
  %905 = vmatpush.msra.mxu0 0.0
  %906 = vmatpush.msra.mxu0 0.0
  %907 = vmatpush.msra.mxu0 0.0
  %908 = vmatpush.msra.mxu0 0.0
  %909 = vmatpush.msra.mxu0 0.0
  %910 = vmatpush.msra.mxu0 0.0
  %911 = vmatpush.msra.mxu0 0.0
  %912 = vmatpush.msra.mxu0 0.0
  %913 = vmatpush.msra.mxu0 %v896
  %914 = vmatmul.f32.gmra.mxu0 %v890
  %v915 = vpop.f32.mrf.mxu0
  %v916 = vadd.f32 0.0, %v915
  %917 = vmatmul.f32.gmra.mxu0 %v893
  %v918 = vpop.f32.mrf.mxu0
  %v919 = vadd.f32 0.0, %v918
  %920 = vdwg.mxu0
  %v922 = vsel %vm259, %v869, 0
  %v925 = vsel %vm259, %v872, 0
  %v928 = vsel %vm308, %v886, 0
  %930 = vmatpush.msra.mxu0 0.0
  %931 = vmatpush.msra.mxu0 0.0
  %932 = vmatpush.msra.mxu0 0.0
  %933 = vmatpush.msra.mxu0 0.0
  %934 = vmatpush.msra.mxu0 0.0
  %935 = vmatpush.msra.mxu0 0.0
  %936 = vmatpush.msra.mxu0 0.0
  %937 = vmatpush.msra.mxu0 0.0
  %938 = vmatpush.msra.mxu0 0.0
  %939 = vmatpush.msra.mxu0 0.0
  %940 = vmatpush.msra.mxu0 0.0
  %941 = vmatpush.msra.mxu0 0.0
  %942 = vmatpush.msra.mxu0 0.0
  %943 = vmatpush.msra.mxu0 0.0
  %944 = vmatpush.msra.mxu0 0.0
  %945 = vmatpush.msra.mxu0 %v928
  %946 = vmatmul.f32.gmra.mxu0 %v922
  %v947 = vpop.f32.mrf.mxu0
  %v948 = vadd.f32 %v916, %v947
  %949 = vmatmul.f32.gmra.mxu0 %v925
  %v950 = vpop.f32.mrf.mxu0
  %v951 = vadd.f32 %v919, %v950
  %952 = vdwg.mxu0
  %s953 = scalar_lea.vmem %s10, 8
  %v954 = vld [vmem:[%s953] sm:$0xf]
  %v956 = vsel %vm259, %v881, 0
  %v959 = vsel %vm259, %v884, 0
  %v962 = vsel %vm308, %v954, 0
  %964 = vmatpush.msra.mxu0 0.0
  %965 = vmatpush.msra.mxu0 0.0
  %966 = vmatpush.msra.mxu0 0.0
  %967 = vmatpush.msra.mxu0 0.0
  %968 = vmatpush.msra.mxu0 0.0
  %969 = vmatpush.msra.mxu0 0.0
  %970 = vmatpush.msra.mxu0 0.0
  %971 = vmatpush.msra.mxu0 0.0
  %972 = vmatpush.msra.mxu0 0.0
  %973 = vmatpush.msra.mxu0 0.0
  %974 = vmatpush.msra.mxu0 0.0
  %975 = vmatpush.msra.mxu0 0.0
  %976 = vmatpush.msra.mxu0 0.0
  %977 = vmatpush.msra.mxu0 0.0
  %978 = vmatpush.msra.mxu0 0.0
  %979 = vmatpush.msra.mxu0 %v962
  %980 = vmatmul.f32.gmra.mxu0 %v956
  %v981 = vpop.f32.mrf.mxu0
  %v982 = vadd.f32 0.0, %v981
  %983 = vmatmul.f32.gmra.mxu0 %v959
  %v984 = vpop.f32.mrf.mxu0
  %v985 = vadd.f32 0.0, %v984
  %986 = vdwg.mxu0
  %v987 = vadd.f32 %v948, %v982
  %v988 = vadd.f32 %v951, %v985
  %v989 = vld [vmem:[%s2] sm:$0xff]
  %v990 = vld [vmem:[%s2 + $0x8] sm:$0xff]
  %v991 = vld [vmem:[%s11] sm:$0xf]
  %v993 = vsel %vm259, %v989, 0
  %v996 = vsel %vm259, %v990, 0
  %v999 = vsel %vm308, %v991, 0
  %1001 = vmatpush.msra.mxu0 0.0
  %1002 = vmatpush.msra.mxu0 0.0
  %1003 = vmatpush.msra.mxu0 0.0
  %1004 = vmatpush.msra.mxu0 0.0
  %1005 = vmatpush.msra.mxu0 0.0
  %1006 = vmatpush.msra.mxu0 0.0
  %1007 = vmatpush.msra.mxu0 0.0
  %1008 = vmatpush.msra.mxu0 0.0
  %1009 = vmatpush.msra.mxu0 0.0
  %1010 = vmatpush.msra.mxu0 0.0
  %1011 = vmatpush.msra.mxu0 0.0
  %1012 = vmatpush.msra.mxu0 0.0
  %1013 = vmatpush.msra.mxu0 0.0
  %1014 = vmatpush.msra.mxu0 0.0
  %1015 = vmatpush.msra.mxu0 0.0
  %1016 = vmatpush.msra.mxu0 %v999
  %1017 = vmatmul.f32.gmra.mxu0 %v993
  %v1018 = vpop.f32.mrf.mxu0
  %v1019 = vadd.f32 0.0, %v1018
  %1020 = vmatmul.f32.gmra.mxu0 %v996
  %v1021 = vpop.f32.mrf.mxu0
  %v1022 = vadd.f32 0.0, %v1021
  %1023 = vdwg.mxu0
  %v1024 = vadd.f32 %v987, %v1019
  %v1025 = vadd.f32 %v988, %v1022
  %v1026 = vld [vmem:[%s12] sm:$0x1]
  %v1028 = vperm.slane %v1026, 0
  %v1030 = vadd.f32 %v1024, %v1028
  %v1031 = vadd.f32 %v1025, %v1028
  %v1032 = vmax.f32 %v1030, 0.0
  %v1033 = vmax.f32 %v1031, 0.0
  %v1034 = vsel %vm259, %v1032, -inf
  %v1035 = vrot.slane %v1034, 4
  %v1036 = vmax.f32 %v1034, %v1035
  %v1037 = vrot.slane %v1036, 2
  %v1038 = vmax.f32 %v1036, %v1037
  %v1039 = vrot.slane %v1038, 1
  %v1040 = vmax.f32 %v1038, %v1039
  %v1041 = vsub.f32 %v1032, %v1040
  %v1042 = vmul.f32 %v1041, 1.442695
  %v1043 = vpow.pop %v1042
  %v1044 = vsel %vm259, %v1043, 0.0
  %v1045 = vrot.slane %v1044, 4
  %v1046 = vadd.f32 %v1044, %v1045
  %v1047 = vrot.slane %v1046, 2
  %v1048 = vadd.f32 %v1046, %v1047
  %v1049 = vrot.slane %v1048, 1
  %v1050 = vadd.f32 %v1048, %v1049
  %v1051 = vlog2.pop %v1050
  %v1052 = vmul.f32 %v1051, 0.6931472
  %v1053 = vadd.f32 %v1052, %v1040
  %v1054 = vsub.f32 %v1032, %v1053
  %1055 = vst.msk [vmem:[%s13] sm:$0xff] %vm259, %v1054
  %v1056 = vsel %vm259, %v1033, -inf
  %v1057 = vrot.slane %v1056, 4
  %v1058 = vmax.f32 %v1056, %v1057
  %v1059 = vrot.slane %v1058, 2
  %v1060 = vmax.f32 %v1058, %v1059
  %v1061 = vrot.slane %v1060, 1
  %v1062 = vmax.f32 %v1060, %v1061
  %v1063 = vsub.f32 %v1033, %v1062
  %v1064 = vmul.f32 %v1063, 1.442695
  %v1065 = vpow.pop %v1064
  %v1066 = vsel %vm259, %v1065, 0.0
  %v1067 = vrot.slane %v1066, 4
  %v1068 = vadd.f32 %v1066, %v1067
  %v1069 = vrot.slane %v1068, 2
  %v1070 = vadd.f32 %v1068, %v1069
  %v1071 = vrot.slane %v1070, 1
  %v1072 = vadd.f32 %v1070, %v1071
  %v1073 = vlog2.pop %v1072
  %v1074 = vmul.f32 %v1073, 0.6931472
  %v1075 = vadd.f32 %v1074, %v1062
  %v1076 = vsub.f32 %v1033, %v1075
  %s1077 = scalar_lea.vmem %s13, 8
  %1078 = vst.msk [vmem:[%s1077] sm:$0xff] %vm259, %v1076
  // Predicated region
  $region54: #{tpu_custom_call.1} parent=0 // pred_check
    _
  $region55: #{tpu_custom_call.1} parent=0 // pred_check_branch
    %1080 = sbr.rel (0) target = $region57
  $region56: #{tpu_custom_call.1} parent=0 // pred_region
    _
  $region57: #{tpu_custom_call.1} parent=0 // pred_fallthru
    _
  // Predicated region
  $region58: #{tpu_custom_call.1} parent=0 // pred_check
    _
  $region59: #{tpu_custom_call.1} parent=0 // pred_check_branch
    %1082 = sbr.rel (0) target = $region61
  $region60: #{tpu_custom_call.1} parent=0 // pred_region
    _
  $region61: #{tpu_custom_call.1} parent=0 // pred_fallthru
    _

</llo_original>
